<compile_context>
chip_gen: v7x
topology: tpu7x:2x2x1
jax: 0.10.0
libtpu: 0.0.40
codegen_flags: <defaults>
</compile_context>

<pallas_src>
import functools

import jax
import jax.numpy as jnp
from jax import lax
from jax.experimental import pallas as pl
from jax.experimental.pallas import tpu as pltpu


def _round_up(x, m):
    return (x + m - 1) // m * m


def _choose_b_tile(batch, b_tile_max=256):
    """Batch tile: as large as possible (<= b_tile_max) while keeping >= 2 batch
    blocks whenever the batch allows it (v7x dual-TC 'parallel' axis split)."""
    b_req = _round_up(batch, 8)
    n_blocks = max(1, pl.cdiv(b_req, b_tile_max))
    if b_req > 8:
        n_blocks = max(n_blocks, 2)
    return _round_up(pl.cdiv(b_req, n_blocks), 8)


def _code2vec_kernel(ctx_ref, mask_ref, wfc_ref, bfc_ref, watt_ref, batt_ref,
                     tag_ref, e_ref, den_ref, v_sc, *, rep_size, num_tags):
    """Grid = (batch blocks ["parallel"], tag tiles ["arbitrary"])."""
    t = pl.program_id(1)

    bt, r_pad, d_in = ctx_ref.shape
    e_pad = wfc_ref.shape[1]
    e_tag, t_tile = tag_ref.shape

    # ---- once per batch block (first tag tile): context encoder + attention pooling
    @pl.when(t == 0)
    def _encode():
        ctx = ctx_ref[...].reshape(bt * r_pad, d_in)           # free reshape (merge leading dims)
        # fc + tanh: MXU matmul (bf16 or f32 operands, f32 accumulation); VPU/EUP in f32.
        cs = jnp.tanh(
            jnp.dot(ctx, wfc_ref[...], preferred_element_type=jnp.float32)
            + bfc_ref[...])                                    # (bt*r_pad, e_pad) f32
        cs = cs.reshape(bt, r_pad, e_pad)
        # rows never written in PyTorch stay exactly zero (cs = torch.zeros init)
        cs = cs * mask_ref[...]                                # (bt, r_pad, 1) mask

        # attention logits: <cs, w_att> + b_att   (lane reduce; b_att is an SMEM scalar)
        att = jnp.sum(cs * watt_ref[...].reshape(1, 1, e_pad),
                      axis=-1, keepdims=True) + batt_ref[0, 0]           # (bt, r_pad, 1)

        # softmax over the rep_size context slots.  Sublane-padding rows (>= rep_size)
        # are excluded; zero rows (< rep_size) contribute the bias only — exactly the
        # PyTorch semantics.
        row_valid = lax.broadcasted_iota(jnp.int32, (bt, r_pad, 1), 1) < rep_size
        att = jnp.where(row_valid, att, -1e30)
        att = att - jnp.max(att, axis=1, keepdims=True)
        p = jnp.where(row_valid, jnp.exp(att), 0.0)
        p = p * pl.reciprocal(jnp.sum(p, axis=1, keepdims=True), approx=True)  # EUP recip

        # v[b] = sum_r p[b, r] * cs[b, r, :]
        v = jnp.sum(cs * p, axis=1)                            # (bt, e_pad) f32
        # Hoisted cast + E-unpad slice: written once, reused by every tag tile.
        v_sc[...] = v[:, :e_tag].astype(v_sc.dtype)
        # Denominator accumulates directly into the (VMEM-resident) output block.
        den_ref[...] = jnp.zeros_like(den_ref)

    # ---- every tag tile: unnormalized exp(logits) + running denominator
    # Tag table is stored transposed (E, T): contract v's dim 1 with tag's dim 0
    # directly on the MXU — no transpose op, no zero-padded E streamed from HBM.
    logits = lax.dot_general(
        v_sc[...], tag_ref[...],
        dimension_numbers=(((1,), (0,)), ((), ())),
        preferred_element_type=jnp.float32)                    # (bt, t_tile)
    tag_idx = t * t_tile + lax.broadcasted_iota(jnp.int32, (bt, t_tile), 1)
    # TODO(synk): the module's tag softmax is unstabilized (exp of raw logits); add a
    # streaming-max (flash-style) rescale across tag tiles if trained weights overflow f32.
    e = jnp.where(tag_idx < num_tags, jnp.exp(logits), 0.0)
    e_ref[...] = e.astype(e_ref.dtype)
    den_ref[...] += jnp.sum(e, axis=1, keepdims=True)          # broadcast over 128 lanes


def prepare_params(W_fc, b_fc, w_att, b_att, tag_matrix, *,
                   input_dtype=jnp.bfloat16, t_tile=512):
    """Pad + cast the model parameters ONCE (not per forward call).

    input_dtype: storage dtype for the big operands (ctx / W_fc / tag).  bf16 default
                 halves HBM traffic; MXU accumulation stays f32.
    t_tile:      preferred tag-axis tile width (capped to the padded tag vocab).
    """
    three_e, emb = W_fc.shape
    num_tags = tag_matrix.shape[0]
    d_in = _round_up(three_e, 128)
    e_pad = _round_up(emb, 128)           # fc output width (lane-dense encode path)
    e_tag = _round_up(emb, 8)             # tag-table E dim: sublane-aligned only
    t_tile = min(t_tile, _round_up(num_tags, 128))
    t_pad = _round_up(num_tags, t_tile)

    W_fc_p = jnp.zeros((d_in, e_pad), input_dtype).at[:three_e, :emb].set(
        W_fc.astype(input_dtype))
    b_fc_p = jnp.zeros((1, e_pad), jnp.float32).at[0, :emb].set(b_fc.astype(jnp.float32))
    w_att_p = jnp.zeros((1, e_pad), jnp.float32).at[0, :emb].set(
        w_att.reshape(-1).astype(jnp.float32))
    b_att_p = b_att.reshape(1, 1).astype(jnp.float32)
    # Tag table stored TRANSPOSED (E, T): the dominant per-step DMA no longer streams
    # zero-padded E columns, and the kernel needs no transpose.
    tag_t = jnp.zeros((e_tag, t_pad), input_dtype).at[:emb, :num_tags].set(
        tag_matrix.T.astype(input_dtype))

    return dict(W_fc=W_fc_p, b_fc=b_fc_p, w_att=w_att_p, b_att=b_att_p, tag_t=tag_t,
                num_tags=num_tags, t_tile=t_tile, e_tag=e_tag)


def code2vec_forward(ctx_emb, mask, params, *, rep_size, b_tile=None,
                     out_dtype=jnp.float32):
    """Batched Code2Vec forward.

    ctx_emb: (B, rep_size, 3E) concatenated [value1 | path | value2] embeddings per
             context slot; rows beyond a function's own context count must be zero.
    mask:    (B, rep_size) with 1.0 where a context was provided, 0.0 otherwise.
    Returns q: (B, num_tags) tag distribution per function.
    """
    B, R, three_e = ctx_emb.shape
    assert R == rep_size
    if b_tile is None:
        b_tile = _choose_b_tile(B)
    assert b_tile % 8 == 0

    d_in, e_pad = params["W_fc"].shape
    e_tag, t_pad = params["tag_t"].shape
    t_tile = params["t_tile"]
    num_tags = params["num_tags"]
    input_dtype = params["W_fc"].dtype

    r_pad = _round_up(rep_size, 8)
    b_pad = _round_up(B, b_tile)

    ctx_p = jnp.zeros((b_pad, r_pad, d_in), input_dtype)
    ctx_p = ctx_p.at[:B, :rep_size, :three_e].set(ctx_emb.astype(input_dtype))
    mask_p = jnp.zeros((b_pad, r_pad, 1), jnp.float32)
    mask_p = mask_p.at[:B, :rep_size, 0].set(mask.astype(jnp.float32))

    grid = (b_pad // b_tile, t_pad // t_tile)
    kernel = functools.partial(_code2vec_kernel, rep_size=rep_size, num_tags=num_tags)

    # VMEM budget (double-buffered) with b_tile<=256 / t_tile<=512 stays ~<= 10 MiB,
    # well under the 32 MiB scoped default on v5e/v6e/v7x — no vmem_limit override.
    e_unnorm, denom = pl.pallas_call(
        kernel,
        out_shape=(jax.ShapeDtypeStruct((b_pad, t_pad), out_dtype),
                   jax.ShapeDtypeStruct((b_pad, 128), jnp.float32)),
        grid_spec=pltpu.PrefetchScalarGridSpec(
            num_scalar_prefetch=0,
            grid=grid,
            in_specs=[
                pl.BlockSpec((b_tile, r_pad, d_in), lambda b, t: (b, 0, 0)),   # contexts
                pl.BlockSpec((b_tile, r_pad, 1), lambda b, t: (b, 0, 0)),      # context mask
                pl.BlockSpec((d_in, e_pad), lambda b, t: (0, 0)),              # W_fc
                pl.BlockSpec((1, e_pad), lambda b, t: (0, 0)),                 # b_fc
                pl.BlockSpec((1, e_pad), lambda b, t: (0, 0)),                 # w_att (row)
                pl.BlockSpec(memory_space=pltpu.MemorySpace.SMEM),             # b_att scalar
                pl.BlockSpec((e_tag, t_tile), lambda b, t: (0, t)),            # tag^T tile
            ],
            out_specs=[
                pl.BlockSpec((b_tile, t_tile), lambda b, t: (b, t)),           # unnormalized exp
                pl.BlockSpec((b_tile, 128), lambda b, t: (b, 0)),              # softmax denominator
            ],
            scratch_shapes=[
                pltpu.VMEM((b_tile, e_tag), input_dtype),                      # v per snippet (tag dtype)
            ]),
        compiler_params=pltpu.CompilerParams(
            dimension_semantics=("parallel", "arbitrary")),
    )(ctx_p, mask_p, params["W_fc"], params["b_fc"], params["w_att"],
      params["b_att"], params["tag_t"])

    # tag-axis normalization: trivial elementwise op, lets the tag table stay tiled.
    return e_unnorm[:B, :num_tags].astype(jnp.float32) / denom[:B, :1]


def reference_forward(ctx_emb, mask, W_fc, b_fc, w_att, b_att, tag_matrix):
    """Pure-JAX reference matching the PyTorch module semantics (batched)."""
    cs = jnp.tanh(ctx_emb @ W_fc + b_fc) * mask[..., None]                    # (B, R, E)
    att_logits = jnp.einsum('bre,e->br', cs, w_att[:, 0]) + b_att[0]          # (B, R)
    att = jax.nn.softmax(att_logits, axis=1)                                  # (B, R)
    v = jnp.einsum('br,bre->be', att, cs)                                     # (B, E)
    logits = v @ tag_matrix.T                                                 # (B, T)
    e = jnp.exp(logits)
    return e / jnp.sum(e, axis=1, keepdims=True)


if __name__ == "__main__":
    embedding_size = 32
    value_vocab_size = 20
    path_vocab_size = 15
    num_tags = 8
    rep_size = 10          # self.rep_size in the module
    batch = 11             # number of functions processed in one kernel launch

    key = jax.random.PRNGKey(0)
    k = jax.random.split(key, 10)

    # Parameters (deterministic init; shapes follow the nn.Module __init__).
    value_emb = jax.random.normal(k[0], (value_vocab_size, embedding_size), jnp.float32)
    path_emb = jax.random.normal(k[1], (path_vocab_size, embedding_size), jnp.float32)
    tag_emb = jax.random.normal(k[2], (num_tags, embedding_size), jnp.float32)
    W_fc = jax.random.normal(k[3], (3 * embedding_size, embedding_size), jnp.float32) * 0.1
    b_fc = jax.random.normal(k[4], (embedding_size,), jnp.float32) * 0.1
    w_att = jax.random.normal(k[5], (embedding_size, 1), jnp.float32) * 0.1
    b_att = jax.random.normal(k[6], (1,), jnp.float32) * 0.1

    # "input_function" batch: context vocab indices + per-function context counts.
    # (The dict lookups value_vocab[token] etc. are pure Python glue.)
    v1_idx = jax.random.randint(k[7], (batch, rep_size), 0, value_vocab_size)
    p_idx = jax.random.randint(k[8], (batch, rep_size), 0, path_vocab_size)
    v2_idx = (v1_idx + 3) % value_vocab_size
    lengths = jax.random.randint(k[9], (batch,), 1, rep_size + 1)

    mask = (jnp.arange(rep_size)[None, :] < lengths[:, None]).astype(jnp.float32)
    ctx = jnp.concatenate([jnp.take(value_emb, v1_idx, axis=0),
                           jnp.take(path_emb, p_idx, axis=0),
                           jnp.take(value_emb, v2_idx, axis=0)], axis=-1)     # (B, R, 3E)
    ctx_emb = ctx * mask[..., None]          # rows beyond len(input_function) stay zero

    q_ref = reference_forward(ctx_emb, mask, W_fc, b_fc, w_att, b_att, tag_emb)

    # float32 parameter storage
    params32 = prepare_params(W_fc, b_fc, w_att, b_att, tag_emb, input_dtype=jnp.float32)
    q32 = jax.block_until_ready(code2vec_forward(ctx_emb, mask, params32, rep_size=rep_size))
    assert q32.shape == (batch, num_tags)
    assert jnp.allclose(jnp.sum(q32, axis=-1), 1.0, atol=1e-4)
    assert jnp.allclose(q32, q_ref, atol=5e-3, rtol=5e-3), (q32, q_ref)

    # bfloat16 storage (the default): half the HBM->VMEM traffic, bf16 MXU path.
    params16 = prepare_params(W_fc, b_fc, w_att, b_att, tag_emb)
    q16 = jax.block_until_ready(code2vec_forward(ctx_emb, mask, params16, rep_size=rep_size))
    assert q16.shape == (batch, num_tags)
    assert jnp.allclose(jnp.sum(q16, axis=-1), 1.0, atol=1e-4)
    assert jnp.allclose(q16, q_ref, atol=5e-2, rtol=1e-1), (q16, q_ref)

    print("KERNEL_OK")
</pallas_src>

<mosaic_0001>
module attributes {stable_mosaic.version = 11 : i64} {
  func.func @_code2vec_kernel(%arg0: i32, %arg1: i32, %arg2: memref<8x16x128xf32, #tpu.memory_space<vmem>>, %arg3: memref<8x16x1xf32, #tpu.memory_space<vmem>>, %arg4: memref<128x128xf32, #tpu.memory_space<vmem>>, %arg5: memref<1x128xf32, #tpu.memory_space<vmem>>, %arg6: memref<1x128xf32, #tpu.memory_space<vmem>>, %arg7: memref<1x1xf32, #tpu.memory_space<smem>>, %arg8: memref<32x128xf32, #tpu.memory_space<vmem>>, %arg9: memref<8x128xf32, #tpu.memory_space<vmem>>, %arg10: memref<8x128xf32, #tpu.memory_space<vmem>>, %arg11: memref<8x32xf32, #tpu.memory_space<vmem>>) attributes {dimension_semantics = [#tpu.dimension_semantics<parallel>, #tpu.dimension_semantics<arbitrary>], iteration_bounds = array<i64: 2, 1>, scalar_prefetch = 0 : i64, scratch_operands = 1 : i64, tpu.core_type = #tpu.core_type<tc>, window_params = [{transform_indices = @transform_0, window_bounds = array<i64: 8, 16, 128>}, {transform_indices = @transform_1, window_bounds = array<i64: 8, 16, 1>}, {pipeline_mode = #tpu.pipeline_mode<synchronous>, transform_indices = @transform_2, window_bounds = array<i64: 128, 128>}, {pipeline_mode = #tpu.pipeline_mode<synchronous>, transform_indices = @transform_3, window_bounds = array<i64: 1, 128>}, {pipeline_mode = #tpu.pipeline_mode<synchronous>, transform_indices = @transform_4, window_bounds = array<i64: 1, 128>}, {transform_indices = @transform_5, window_bounds = array<i64: 1, 1>}, {transform_indices = @transform_6, window_bounds = array<i64: 32, 128>}, {transform_indices = @transform_7, window_bounds = array<i64: 8, 128>}, {transform_indices = @transform_8, window_bounds = array<i64: 8, 128>}]} {
    %c0_i32 = arith.constant 0 : i32
    %0 = arith.cmpi eq, %arg1, %c0_i32 : i32
    %1 = arith.extui %0 : i1 to i32
    %c0_i32_0 = arith.constant 0 : i32
    %2 = arith.cmpi ne, %1, %c0_i32_0 : i32
    scf.if %2 {
      %c0_12 = arith.constant 0 : index
      %c0_13 = arith.constant 0 : index
      %c0_14 = arith.constant 0 : index
      %22 = vector.load %arg2[%c0_12, %c0_13, %c0_14] : memref<8x16x128xf32, #tpu.memory_space<vmem>>, vector<8x16x128xf32>
      %23 = vector.shape_cast %22 : vector<8x16x128xf32> to vector<128x128xf32>
      %c0_15 = arith.constant 0 : index
      %c0_16 = arith.constant 0 : index
      %24 = vector.load %arg4[%c0_15, %c0_16] : memref<128x128xf32, #tpu.memory_space<vmem>>, vector<128x128xf32>
      %cst_17 = arith.constant dense<0.000000e+00> : vector<128x128xf32>
      %25 = tpu.matmul %23, %24, %cst_17 {dimension_numbers = #tpu.dot_dimension_numbers<[1], [0], [0], [1], [0, 0, 1, 1], [], []>} : vector<128x128xf32>, vector<128x128xf32>, vector<128x128xf32> -> vector<128x128xf32>
      %c0_18 = arith.constant 0 : index
      %c0_19 = arith.constant 0 : index
      %26 = vector.load %arg5[%c0_18, %c0_19] : memref<1x128xf32, #tpu.memory_space<vmem>>, vector<1x128xf32>
      %27 = vector.broadcast %26 : vector<1x128xf32> to vector<128x128xf32>
      %28 = arith.addf %25, %27 : vector<128x128xf32>
      %29 = math.tanh %28 : vector<128x128xf32>
      %30 = vector.shape_cast %29 : vector<128x128xf32> to vector<8x16x128xf32>
      %c0_20 = arith.constant 0 : index
      %c0_21 = arith.constant 0 : index
      %c0_22 = arith.constant 0 : index
      %31 = vector.load %arg3[%c0_20, %c0_21, %c0_22] : memref<8x16x1xf32, #tpu.memory_space<vmem>>, vector<8x16x1xf32>
      %32 = vector.broadcast %31 : vector<8x16x1xf32> to vector<8x16x128xf32>
      %33 = arith.mulf %30, %32 : vector<8x16x128xf32>
      %c0_23 = arith.constant 0 : index
      %c0_24 = arith.constant 0 : index
      %34 = vector.load %arg6[%c0_23, %c0_24] : memref<1x128xf32, #tpu.memory_space<vmem>>, vector<1x128xf32>
      %35 = vector.shape_cast %34 : vector<1x128xf32> to vector<1x1x128xf32>
      %36 = vector.broadcast %35 : vector<1x1x128xf32> to vector<8x16x128xf32>
      %37 = arith.mulf %33, %36 : vector<8x16x128xf32>
      %cst_25 = arith.constant dense<0.000000e+00> : vector<8x16xf32>
      %38 = vector.multi_reduction <add>, %37, %cst_25 [2] : vector<8x16x128xf32> to vector<8x16xf32>
      %39 = vector.shape_cast %38 : vector<8x16xf32> to vector<8x16x1xf32>
      %c0_26 = arith.constant 0 : index
      %c0_27 = arith.constant 0 : index
      %40 = memref.load %arg7[%c0_26, %c0_27] : memref<1x1xf32, #tpu.memory_space<smem>>
      %41 = vector.broadcast %40 : f32 to vector<8x16x1xf32>
      %42 = arith.addf %39, %41 : vector<8x16x1xf32>
      %43 = tpu.iota {dimensions = array<i32: 1>} : vector<8x16x1xi32>
      %c10_i32 = arith.constant 10 : i32
      %44 = vector.broadcast %c10_i32 : i32 to vector<8x16x1xi32>
      %45 = arith.cmpi slt, %43, %44 : vector<8x16x1xi32>
      %cst_28 = arith.constant -1.000000e+30 : f32
      %46 = vector.broadcast %cst_28 : f32 to vector<8x16x1xf32>
      %47 = arith.select %45, %42, %46 : vector<8x16x1xi1>, vector<8x16x1xf32>
      %cst_29 = arith.constant dense<0xFF800000> : vector<8x1xf32>
      %48 = vector.multi_reduction <maximumf>, %47, %cst_29 [1] : vector<8x16x1xf32> to vector<8x1xf32>
      %49 = vector.shape_cast %48 : vector<8x1xf32> to vector<8x1x1xf32>
      %50 = vector.broadcast %49 : vector<8x1x1xf32> to vector<8x16x1xf32>
      %51 = arith.subf %47, %50 : vector<8x16x1xf32>
      %52 = math.exp %51 : vector<8x16x1xf32>
      %cst_30 = arith.constant 0.000000e+00 : f32
      %53 = vector.broadcast %cst_30 : f32 to vector<8x16x1xf32>
      %54 = arith.select %45, %52, %53 : vector<8x16x1xi1>, vector<8x16x1xf32>
      %cst_31 = arith.constant dense<0.000000e+00> : vector<8x1xf32>
      %55 = vector.multi_reduction <add>, %54, %cst_31 [1] : vector<8x16x1xf32> to vector<8x1xf32>
      %56 = vector.shape_cast %55 : vector<8x1xf32> to vector<8x1x1xf32>
      %57 = tpu.reciprocal %56 {approx = true} : vector<8x1x1xf32> -> vector<8x1x1xf32>
      %58 = vector.broadcast %57 : vector<8x1x1xf32> to vector<8x16x1xf32>
      %59 = arith.mulf %54, %58 : vector<8x16x1xf32>
      %60 = vector.broadcast %59 : vector<8x16x1xf32> to vector<8x16x128xf32>
      %61 = arith.mulf %33, %60 : vector<8x16x128xf32>
      %cst_32 = arith.constant dense<0.000000e+00> : vector<8x128xf32>
      %62 = vector.multi_reduction <add>, %61, %cst_32 [1] : vector<8x16x128xf32> to vector<8x128xf32>
      %63 = vector.extract_strided_slice %62 {offsets = [0, 0], sizes = [8, 32], strides = [1, 1]} : vector<8x128xf32> to vector<8x32xf32>
      %c0_33 = arith.constant 0 : index
      %c0_34 = arith.constant 0 : index
      %64 = vector.load %arg11[%c0_33, %c0_34] : memref<8x32xf32, #tpu.memory_space<vmem>>, vector<8x32xf32>
      tpu.vector_store %arg11[%c0_33, %c0_34], %63 {strides = array<i32>} : memref<8x32xf32, #tpu.memory_space<vmem>>, vector<8x32xf32>,
      %cst_35 = arith.constant 0.000000e+00 : f32
      %65 = vector.broadcast %cst_35 : f32 to vector<8x128xf32>
      %c0_36 = arith.constant 0 : index
      %c0_37 = arith.constant 0 : index
      %66 = vector.load %arg10[%c0_36, %c0_37] : memref<8x128xf32, #tpu.memory_space<vmem>>, vector<8x128xf32>
      tpu.vector_store %arg10[%c0_36, %c0_37], %65 {strides = array<i32>} : memref<8x128xf32, #tpu.memory_space<vmem>>, vector<8x128xf32>,
    } else {
    }
    %c0 = arith.constant 0 : index
    %c0_1 = arith.constant 0 : index
    %3 = vector.load %arg11[%c0, %c0_1] : memref<8x32xf32, #tpu.memory_space<vmem>>, vector<8x32xf32>
    %c0_2 = arith.constant 0 : index
    %c0_3 = arith.constant 0 : index
    %4 = vector.load %arg8[%c0_2, %c0_3] : memref<32x128xf32, #tpu.memory_space<vmem>>, vector<32x128xf32>
    %cst = arith.constant dense<0.000000e+00> : vector<8x128xf32>
    %5 = tpu.matmul %3, %4, %cst {dimension_numbers = #tpu.dot_dimension_numbers<[1], [0], [0], [1], [0, 0, 1, 1], [], []>} : vector<8x32xf32>, vector<32x128xf32>, vector<8x128xf32> -> vector<8x128xf32>
    %c128_i32 = arith.constant 128 : i32
    %6 = arith.muli %arg1, %c128_i32 : i32
    %7 = tpu.iota {dimensions = array<i32: 1>} : vector<8x128xi32>
    %8 = vector.broadcast %6 : i32 to vector<8x128xi32>
    %9 = arith.addi %8, %7 : vector<8x128xi32>
    %c8_i32 = arith.constant 8 : i32
    %10 = vector.broadcast %c8_i32 : i32 to vector<8x128xi32>
    %11 = arith.cmpi slt, %9, %10 : vector<8x128xi32>
    %12 = math.exp %5 : vector<8x128xf32>
    %cst_4 = arith.constant 0.000000e+00 : f32
    %13 = vector.broadcast %cst_4 : f32 to vector<8x128xf32>
    %14 = arith.select %11, %12, %13 : vector<8x128xi1>, vector<8x128xf32>
    %c0_5 = arith.constant 0 : index
    %c0_6 = arith.constant 0 : index
    %15 = vector.load %arg9[%c0_5, %c0_6] : memref<8x128xf32, #tpu.memory_space<vmem>>, vector<8x128xf32>
    tpu.vector_store %arg9[%c0_5, %c0_6], %14 {strides = array<i32>} : memref<8x128xf32, #tpu.memory_space<vmem>>, vector<8x128xf32>,
    %c0_7 = arith.constant 0 : index
    %c0_8 = arith.constant 0 : index
    %16 = vector.load %arg10[%c0_7, %c0_8] : memref<8x128xf32, #tpu.memory_space<vmem>>, vector<8x128xf32>
    %cst_9 = arith.constant dense<0.000000e+00> : vector<8xf32>
    %17 = vector.multi_reduction <add>, %14, %cst_9 [1] : vector<8x128xf32> to vector<8xf32>
    %18 = vector.shape_cast %17 : vector<8xf32> to vector<8x1xf32>
    %19 = vector.broadcast %18 : vector<8x1xf32> to vector<8x128xf32>
    %20 = arith.addf %16, %19 : vector<8x128xf32>
    %c0_10 = arith.constant 0 : index
    %c0_11 = arith.constant 0 : index
    %21 = vector.load %arg10[%c0_10, %c0_11] : memref<8x128xf32, #tpu.memory_space<vmem>>, vector<8x128xf32>
    tpu.vector_store %arg10[%c0_10, %c0_11], %20 {strides = array<i32>} : memref<8x128xf32, #tpu.memory_space<vmem>>, vector<8x128xf32>,
    return
  }
  func.func @transform_0(%arg0: i32, %arg1: i32) -> (i32, i32, i32) {
    %c0_i32 = arith.constant 0 : i32
    %c0_i32_0 = arith.constant 0 : i32
    %c0_i32_1 = arith.constant 0 : i32
    return %arg0, %c0_i32, %c0_i32_0 : i32, i32, i32
  }
  func.func @transform_1(%arg0: i32, %arg1: i32) -> (i32, i32, i32) {
    %c0_i32 = arith.constant 0 : i32
    %c0_i32_0 = arith.constant 0 : i32
    %c0_i32_1 = arith.constant 0 : i32
    return %arg0, %c0_i32, %c0_i32_0 : i32, i32, i32
  }
  func.func @transform_2(%arg0: i32, %arg1: i32) -> (i32, i32) {
    %c0_i32 = arith.constant 0 : i32
    %c0_i32_0 = arith.constant 0 : i32
    %c0_i32_1 = arith.constant 0 : i32
    return %c0_i32, %c0_i32_0 : i32, i32
  }
  func.func @transform_3(%arg0: i32, %arg1: i32) -> (i32, i32) {
    %c0_i32 = arith.constant 0 : i32
    %c0_i32_0 = arith.constant 0 : i32
    %c0_i32_1 = arith.constant 0 : i32
    return %c0_i32, %c0_i32_0 : i32, i32
  }
  func.func @transform_4(%arg0: i32, %arg1: i32) -> (i32, i32) {
    %c0_i32 = arith.constant 0 : i32
    %c0_i32_0 = arith.constant 0 : i32
    %c0_i32_1 = arith.constant 0 : i32
    return %c0_i32, %c0_i32_0 : i32, i32
  }
  func.func @transform_5(%arg0: i32, %arg1: i32) -> (i32, i32) {
    %c0_i32 = arith.constant 0 : i32
    %c0_i32_0 = arith.constant 0 : i32
    %c0_i32_1 = arith.constant 0 : i32
    return %c0_i32, %c0_i32_0 : i32, i32
  }
  func.func @transform_6(%arg0: i32, %arg1: i32) -> (i32, i32) {
    %c0_i32 = arith.constant 0 : i32
    %c0_i32_0 = arith.constant 0 : i32
    return %c0_i32, %arg1 : i32, i32
  }
  func.func @transform_7(%arg0: i32, %arg1: i32) -> (i32, i32) {
    %c0_i32 = arith.constant 0 : i32
    return %arg0, %arg1 : i32, i32
  }
  func.func @transform_8(%arg0: i32, %arg1: i32) -> (i32, i32) {
    %c0_i32 = arith.constant 0 : i32
    %c0_i32_0 = arith.constant 0 : i32
    return %arg0, %c0_i32 : i32, i32
  }
}

</mosaic_0001>

<llo_original>
// kernel: tpu_custom_call.1
$region0: #{tpu_custom_call.1}
  #allocation0 [shape = 'u32[]', space=smem, size = 0x4, offset = 0x4, fixed_abs, tag = 'smem constant byte address 0x4 - core index']
  #allocation1 [shape = 'u32[144,128]{1,0:T(1,128)}', space=vmem, size = 0x12000, scoped, tag = 'internal scratch']
  #allocation2 [shape = 'f32[8,32]{1,0:T(8,128)}', space=vmem, size = 0x1000, scoped, tag = 'scratch operand']
  #allocation3 [shape = 'f32[1,1]{1,0:T(1,128)S(6)}', space=smem, size = 0x200, scoped, tag = 'scoped memory for tpu_custom_call.1']
  %s0 = inlined_call_operand.vmem [shape: f32[16,16,128], index: 0, kind: input, shape index: {}]
  %s1 = inlined_call_operand.vmem [shape: f32[16,16,1], index: 1, kind: input, shape index: {}]
  %s2 = inlined_call_operand.hbm [shape: f32[128,128], index: 2, kind: input, shape index: {}]
  %s3 = inlined_call_operand.vmem [shape: f32[1,128], index: 3, kind: input, shape index: {}]
  %s4 = inlined_call_operand.vmem [shape: f32[1,128], index: 4, kind: input, shape index: {}]
  %s5 = inlined_call_operand.<no memory space> [shape: f32[1,1], index: 5, kind: input, shape index: {}]
  %s6 = inlined_call_operand.vmem [shape: f32[32,128], index: 6, kind: input, shape index: {}]
  %s7 = inlined_call_operand.hbm [shape: f32[16,128], index: 7, kind: output, shape index: {0}]
  %s8 = inlined_call_operand.hbm [shape: f32[16,128], index: 8, kind: output, shape index: {1}]
  %9 = xla_tuple %s7, %s8
  %s10 = sld [smem:[#allocation0]]
  $region77: #{tpu_custom_call.1} parent=0
    _
  %s12 = ssub.s32 1, %s10
  %s13 = scalar_select 0, %s12, %s10
  %14 = sst [smem:[#allocation3]] %s5
  $region1: #{tpu_custom_call.1} parent=0
    #allocation4 [shape = 'u8[65536]{0}', space=vmem, size = 0x10000, scoped, tag = 'input window, operand 2, single buffered']
    #allocation5 [shape = 's32[2]{0}', space=sflag, size = 0x8, scoped, tag = 'scoped memory for tpu_custom_call.1']
    #allocation6 [shape = 's32[2]{0}', space=sflag, size = 0x8, scoped, tag = 'scoped memory for tpu_custom_call.1']
    #allocation7 [shape = 'u8[8192]{0}', space=vmem, size = 0x2000, scoped, tag = 'output window, operand 0']
    #allocation8 [shape = 'u8[8192]{0}', space=vmem, size = 0x2000, scoped, tag = 'output window, operand 1']
    #allocation9 [shape = 's32[2]{0}', space=sflag, size = 0x8, scoped, tag = 'scoped memory for tpu_custom_call.1']
    %15 = vsyncpa [#allocation5], 0
    %16 = vsyncpa [#allocation6], 0
    %s17 = scalar_lea.sflag [#allocation6], 1
    %18 = vsyncpa %s17, 0
    %19 = vsyncpa [#allocation9], 0
    %s20 = scalar_lea.sflag [#allocation9], 1
    %21 = vsyncpa %s20, 0
    loop: start=0, step=1, limit=4
    $region2: #{tpu_custom_call.1} parent=1 // loop_pre_header
      _
    $region3: #{tpu_custom_call.1} parent=1 // loop_header
      %s23 = sphi 0, %s27
      %p24 = scmp.ge.s32.totalorder %s23, 4
      %s30 = sphi 0, %s42
      %s31 = sphi 0, %s38
      %s32 = sphi 0, %s30
      %s33 = sphi 0, %s31
      %s34 = sphi 0, %s32
      %s35 = sphi 0, %s33
      %s45 = sphi 0, %s47
      %s48 = sphi 0, %s45
      %s49 = sphi 0, %s48
      %s65 = sphi 0, %s49
      %s71 = sphi 0, %s73
      %s74 = sphi 0, %s71
      %s75 = sphi 0, %s74
      %s91 = sphi 0, %s75
      %s95 = sphi 0, %s95
      %s97 = sphi 0, %s95
      %s98 = sphi 0, %s97
      %s112 = sphi 0, %s98
      %s116 = sphi 0, %s116
      %s118 = sphi 0, %s116
      %s119 = sphi 0, %s118
      %s133 = sphi 0, %s119
      %s137 = sphi 0, %s137
      %s139 = sphi 0, %s137
      %s140 = sphi 0, %s139
      %s154 = sphi 0, %s140
      %s158 = sphi 0, %s158
      %s160 = sphi 0, %s158
      %s161 = sphi 0, %s160
      %s175 = sphi 0, %s161
      %s181 = sphi 0, %s183
      %s184 = sphi 0, %s181
      %s185 = sphi 0, %s184
      %s201 = sphi 0, %s185
      %s209 = sphi 0, %s211
      %s212 = sphi 0, %s209
      %s213 = sphi 0, %s212
      %s229 = sphi 0, %s213
      %s235 = sphi 0, %s237
      %s238 = sphi 0, %s235
      %s239 = sphi 0, %s238
      %s255 = sphi 0, %s239
    $region4: #{tpu_custom_call.1} parent=1 // loop_header_branch
      %26 = sbr.rel (%p24) target = $region8
    $region5: #{tpu_custom_call.1} parent=1 // loop_body
      %s28 = ssub.s32 %s23, 1
      %s29 = ssub.s32 %s23, 2
      %s36 = sadd.s32 1, %s31
      %p37 = scmp.ge.s32.totalorder %s36, 1
      %s38 = scalar_select %p37, 0, %s36
      %s39 = sadd.s32 1, %s30
      %s40 = scalar_select %p37, %s39, %s30
      %p41 = scmp.ge.s32.totalorder %s40, 2
      %s42 = scalar_select %p41, 0, %s40
      %s43 = ssub.s32 %s30, %s42
      %p44 = scmp.eq.s32.totalorder %s43, 0
      %s46 = sadd.s32 %s45, 1
      %s47 = scalar_select %p44, %s45, %s46
      %p50 = pneg %p44
      %p51 = scmp.eq.s32.totalorder %s23, 1
      %p52 = por %p50, %p51
      %p53 = scmp.ne.s32.totalorder %s45, %s48
      %p54 = scmp.eq.s32.totalorder %s23, 0
      %p55 = por %p53, %p54
      %p56 = scmp.ne.s32.totalorder %s45, %s48
      %p57 = scmp.eq.s32.totalorder %s28, 1
      %p58 = por %p56, %p57
      %p59 = scmp.ne.s32.totalorder %s48, %s49
      %p60 = scmp.eq.s32.totalorder %s28, 0
      %p61 = por %p59, %p60
      %p62 = scmp.ne.s32.totalorder %s48, %s49
      %p63 = scmp.eq.s32.totalorder %s29, 1
      %p64 = por %p62, %p63
      %p66 = scmp.ne.s32.totalorder %s49, %s65
      %p67 = scmp.eq.s32.totalorder %s29, 0
      %p68 = por %p66, %p67
      %s69 = ssub.s32 %s30, %s42
      %p70 = scmp.eq.s32.totalorder %s69, 0
      %s72 = sadd.s32 %s71, 1
      %s73 = scalar_select %p70, %s71, %s72
      %p76 = pneg %p70
      %p77 = scmp.eq.s32.totalorder %s23, 1
      %p78 = por %p76, %p77
      %p79 = scmp.ne.s32.totalorder %s71, %s74
      %p80 = scmp.eq.s32.totalorder %s23, 0
      %p81 = por %p79, %p80
      %p82 = scmp.ne.s32.totalorder %s71, %s74
      %p83 = scmp.eq.s32.totalorder %s28, 1
      %p84 = por %p82, %p83
      %p85 = scmp.ne.s32.totalorder %s74, %s75
      %p86 = scmp.eq.s32.totalorder %s28, 0
      %p87 = por %p85, %p86
      %p88 = scmp.ne.s32.totalorder %s74, %s75
      %p89 = scmp.eq.s32.totalorder %s29, 1
      %p90 = por %p88, %p89
      %p92 = scmp.ne.s32.totalorder %s75, %s91
      %p93 = scmp.eq.s32.totalorder %s29, 0
      %p94 = por %p92, %p93
      %s96 = sadd.s32 %s95, 1
      %p99 = scmp.eq.s32.totalorder %s23, 1
      %p100 = scmp.ne.s32.totalorder %s95, %s97
      %p101 = scmp.eq.s32.totalorder %s23, 0
      %p102 = por %p100, %p101
      %p103 = scmp.ne.s32.totalorder %s95, %s97
      %p104 = scmp.eq.s32.totalorder %s28, 1
      %p105 = por %p103, %p104
      %p106 = scmp.ne.s32.totalorder %s97, %s98
      %p107 = scmp.eq.s32.totalorder %s28, 0
      %p108 = por %p106, %p107
      %p109 = scmp.ne.s32.totalorder %s97, %s98
      %p110 = scmp.eq.s32.totalorder %s29, 1
      %p111 = por %p109, %p110
      %p113 = scmp.ne.s32.totalorder %s98, %s112
      %p114 = scmp.eq.s32.totalorder %s29, 0
      %p115 = por %p113, %p114
      %s117 = sadd.s32 %s116, 1
      %p120 = scmp.eq.s32.totalorder %s23, 1
      %p121 = scmp.ne.s32.totalorder %s116, %s118
      %p122 = scmp.eq.s32.totalorder %s23, 0
      %p123 = por %p121, %p122
      %p124 = scmp.ne.s32.totalorder %s116, %s118
      %p125 = scmp.eq.s32.totalorder %s28, 1
      %p126 = por %p124, %p125
      %p127 = scmp.ne.s32.totalorder %s118, %s119
      %p128 = scmp.eq.s32.totalorder %s28, 0
      %p129 = por %p127, %p128
      %p130 = scmp.ne.s32.totalorder %s118, %s119
      %p131 = scmp.eq.s32.totalorder %s29, 1
      %p132 = por %p130, %p131
      %p134 = scmp.ne.s32.totalorder %s119, %s133
      %p135 = scmp.eq.s32.totalorder %s29, 0
      %p136 = por %p134, %p135
      %s138 = sadd.s32 %s137, 1
      %p141 = scmp.eq.s32.totalorder %s23, 1
      %p142 = scmp.ne.s32.totalorder %s137, %s139
      %p143 = scmp.eq.s32.totalorder %s23, 0
      %p144 = por %p142, %p143
      %p145 = scmp.ne.s32.totalorder %s137, %s139
      %p146 = scmp.eq.s32.totalorder %s28, 1
      %p147 = por %p145, %p146
      %p148 = scmp.ne.s32.totalorder %s139, %s140
      %p149 = scmp.eq.s32.totalorder %s28, 0
      %p150 = por %p148, %p149
      %p151 = scmp.ne.s32.totalorder %s139, %s140
      %p152 = scmp.eq.s32.totalorder %s29, 1
      %p153 = por %p151, %p152
      %p155 = scmp.ne.s32.totalorder %s140, %s154
      %p156 = scmp.eq.s32.totalorder %s29, 0
      %p157 = por %p155, %p156
      %s159 = sadd.s32 %s158, 1
      %p162 = scmp.eq.s32.totalorder %s23, 1
      %p163 = scmp.ne.s32.totalorder %s158, %s160
      %p164 = scmp.eq.s32.totalorder %s23, 0
      %p165 = por %p163, %p164
      %p166 = scmp.ne.s32.totalorder %s158, %s160
      %p167 = scmp.eq.s32.totalorder %s28, 1
      %p168 = por %p166, %p167
      %p169 = scmp.ne.s32.totalorder %s160, %s161
      %p170 = scmp.eq.s32.totalorder %s28, 0
      %p171 = por %p169, %p170
      %p172 = scmp.ne.s32.totalorder %s160, %s161
      %p173 = scmp.eq.s32.totalorder %s29, 1
      %p174 = por %p172, %p173
      %p176 = scmp.ne.s32.totalorder %s161, %s175
      %p177 = scmp.eq.s32.totalorder %s29, 0
      %p178 = por %p176, %p177
      %s179 = ssub.s32 %s31, %s38
      %p180 = scmp.eq.s32.totalorder %s179, 0
      %s182 = sadd.s32 %s181, 1
      %s183 = scalar_select %p180, %s181, %s182
      %p186 = pneg %p180
      %p187 = scmp.eq.s32.totalorder %s23, 1
      %p188 = por %p186, %p187
      %p189 = scmp.ne.s32.totalorder %s181, %s184
      %p190 = scmp.eq.s32.totalorder %s23, 0
      %p191 = por %p189, %p190
      %p192 = scmp.ne.s32.totalorder %s181, %s184
      %p193 = scmp.eq.s32.totalorder %s28, 1
      %p194 = por %p192, %p193
      %p195 = scmp.ne.s32.totalorder %s184, %s185
      %p196 = scmp.eq.s32.totalorder %s28, 0
      %p197 = por %p195, %p196
      %p198 = scmp.ne.s32.totalorder %s184, %s185
      %p199 = scmp.eq.s32.totalorder %s29, 1
      %p200 = por %p198, %p199
      %p202 = scmp.ne.s32.totalorder %s185, %s201
      %p203 = scmp.eq.s32.totalorder %s29, 0
      %p204 = por %p202, %p203
      %s205 = ssub.s32 %s30, %s42
      %s206 = ssub.s32 %s31, %s38
      %s207 = sor.u32 %s205, %s206
      %p208 = scmp.eq.s32.totalorder %s207, 0
      %s210 = sadd.s32 %s209, 1
      %s211 = scalar_select %p208, %s209, %s210
      %p214 = pneg %p208
      %p215 = scmp.eq.s32.totalorder %s23, 1
      %p216 = por %p214, %p215
      %p217 = scmp.ne.s32.totalorder %s209, %s212
      %p218 = scmp.eq.s32.totalorder %s23, 0
      %p219 = por %p217, %p218
      %p220 = scmp.ne.s32.totalorder %s209, %s212
      %p221 = scmp.eq.s32.totalorder %s28, 1
      %p222 = por %p220, %p221
      %p223 = scmp.ne.s32.totalorder %s212, %s213
      %p224 = scmp.eq.s32.totalorder %s28, 0
      %p225 = por %p223, %p224
      %p226 = scmp.ne.s32.totalorder %s212, %s213
      %p227 = scmp.eq.s32.totalorder %s29, 1
      %p228 = por %p226, %p227
      %p230 = scmp.ne.s32.totalorder %s213, %s229
      %p231 = scmp.eq.s32.totalorder %s29, 0
      %p232 = por %p230, %p231
      %s233 = ssub.s32 %s30, %s42
      %p234 = scmp.eq.s32.totalorder %s233, 0
      %s236 = sadd.s32 %s235, 1
      %s237 = scalar_select %p234, %s235, %s236
      %p240 = pneg %p234
      %p241 = scmp.eq.s32.totalorder %s23, 1
      %p242 = por %p240, %p241
      %p243 = scmp.ne.s32.totalorder %s235, %s238
      %p244 = scmp.eq.s32.totalorder %s23, 0
      %p245 = por %p243, %p244
      %p246 = scmp.ne.s32.totalorder %s235, %s238
      %p247 = scmp.eq.s32.totalorder %s28, 1
      %p248 = por %p246, %p247
      %p249 = scmp.ne.s32.totalorder %s238, %s239
      %p250 = scmp.eq.s32.totalorder %s28, 0
      %p251 = por %p249, %p250
      %p252 = scmp.ne.s32.totalorder %s238, %s239
      %p253 = scmp.eq.s32.totalorder %s29, 1
      %p254 = por %p252, %p253
      %p256 = scmp.ne.s32.totalorder %s239, %s255
      %p257 = scmp.eq.s32.totalorder %s29, 0
      %p258 = por %p256, %p257
      %p259 = scmp.le.s32.totalorder 1, %s23
      %p260 = scmp.lt.s32.totalorder %s23, 3
      %p261 = pnand %p259, %p260
      %p262 = pneg %p261
      // Predicated region
      $region9: #{tpu_custom_call.1} parent=5 // pred_check
        _
      $region10: #{tpu_custom_call.1} parent=5 // pred_check_branch
        %264 = sbr.rel (%p261) target = $region12
      $region11: #{tpu_custom_call.1} parent=5 // pred_region
        %s265 = ssub.s32 %s23, 1
        // Predicated region
        $region13: #{tpu_custom_call.1} parent=11 // pred_check
          %p266 = pneg %p108
        $region14: #{tpu_custom_call.1} parent=11 // pred_check_branch
          %268 = sbr.rel (%p266) target = $region16
        $region15: #{tpu_custom_call.1} parent=11 // pred_region
          %s270 = ssub.s32 2048, 2048
          %271 = vsyncadd [#allocation5], %s270
          %s272 = sshll.u32 [#allocation4], 4
          %s273 = int_to_ptr.vmem [resolvable:$true] %s272
          %278 = dma.hbm_to_vmem [thread:$0]  %s2, 2048, %s273, [#allocation5], 128, 128, 8
        $region16: #{tpu_custom_call.1} parent=11 // pred_fallthru
          _
        // Predicated region
        $region17: #{tpu_custom_call.1} parent=11 // pred_check
          %p279 = pneg %p129
        $region18: #{tpu_custom_call.1} parent=11 // pred_check_branch
          %281 = sbr.rel (%p279) target = $region20
        $region19: #{tpu_custom_call.1} parent=11 // pred_region
          _
        $region20: #{tpu_custom_call.1} parent=11 // pred_fallthru
          _
        // Predicated region
        $region21: #{tpu_custom_call.1} parent=11 // pred_check
          %p282 = pneg %p150
        $region22: #{tpu_custom_call.1} parent=11 // pred_check_branch
          %284 = sbr.rel (%p282) target = $region24
        $region23: #{tpu_custom_call.1} parent=11 // pred_region
          _
        $region24: #{tpu_custom_call.1} parent=11 // pred_fallthru
          _
        // Predicated region
        $region25: #{tpu_custom_call.1} parent=11 // pred_check
          %p285 = pneg %p171
        $region26: #{tpu_custom_call.1} parent=11 // pred_check_branch
          %287 = sbr.rel (%p285) target = $region28
        $region27: #{tpu_custom_call.1} parent=11 // pred_region
          _
        $region28: #{tpu_custom_call.1} parent=11 // pred_fallthru
          _
        // Predicated region
        $region29: #{tpu_custom_call.1} parent=11 // pred_check
          %p288 = pneg %p197
        $region30: #{tpu_custom_call.1} parent=11 // pred_check_branch
          %290 = sbr.rel (%p288) target = $region32
        $region31: #{tpu_custom_call.1} parent=11 // pred_region
          %p291 = scmp.lt.s32.totalorder %s33, 0
          %s292 = scalar_select %p291, %s33, 0
          %s293 = smul.addr %s292, 8
          %s294 = scalar_lea.vmem %s6, %s293
        $region32: #{tpu_custom_call.1} parent=11 // pred_fallthru
          _
      $region12: #{tpu_custom_call.1} parent=5 // pred_fallthru
        _
      %p295 = scmp.lt.s32.totalorder %s23, 2
      // Predicated region
      $region33: #{tpu_custom_call.1} parent=5 // pred_check
        %p296 = pneg %p295
      $region34: #{tpu_custom_call.1} parent=5 // pred_check_branch
        %298 = sbr.rel (%p296) target = $region36
      $region35: #{tpu_custom_call.1} parent=5 // pred_region
        // Predicated region
        $region37: #{tpu_custom_call.1} parent=35 // pred_check
          %p299 = pneg %p55
        $region38: #{tpu_custom_call.1} parent=35 // pred_check_branch
          %301 = sbr.rel (%p299) target = $region40
        $region39: #{tpu_custom_call.1} parent=35 // pred_region
          %s302 = smul.u32 8, %s30
          %p303 = scmp.lt.s32.totalorder %s302, 15
          %s304 = scalar_select %p303, %s302, 15
          %s305 = smul.addr %s304, 2
          %s306 = smul.addr %s305, 8
          %s307 = scalar_lea.vmem %s0, %s306
          %s308 = smul.u32 8, %s30
        $region40: #{tpu_custom_call.1} parent=35 // pred_fallthru
          _
        // Predicated region
        $region41: #{tpu_custom_call.1} parent=35 // pred_check
          %p309 = pneg %p81
        $region42: #{tpu_custom_call.1} parent=35 // pred_check_branch
          %311 = sbr.rel (%p309) target = $region44
        $region43: #{tpu_custom_call.1} parent=35 // pred_region
          %s312 = smul.u32 8, %s30
          %p313 = scmp.lt.s32.totalorder %s312, 15
          %s314 = scalar_select %p313, %s312, 15
          %s315 = smul.addr %s314, 2
          %s316 = smul.addr %s315, 8
          %s317 = scalar_lea.vmem %s1, %s316
          %s318 = smul.u32 8, %s30
        $region44: #{tpu_custom_call.1} parent=35 // pred_fallthru
          _
      $region36: #{tpu_custom_call.1} parent=5 // pred_fallthru
        _
      %p319 = scmp.le.s32.totalorder 1, %s23
      %p320 = scmp.lt.s32.totalorder %s23, 3
      %p321 = pnand %p319, %p320
      %p322 = pneg %p321
      // Predicated region
      $region45: #{tpu_custom_call.1} parent=5 // pred_check
        _
      $region46: #{tpu_custom_call.1} parent=5 // pred_check_branch
        %324 = sbr.rel (%p321) target = $region48
      $region47: #{tpu_custom_call.1} parent=5 // pred_region
        %s325 = ssub.s32 %s23, 1
        // Predicated region
        $region49: #{tpu_custom_call.1} parent=47 // pred_check
          %p326 = pneg %p108
        $region50: #{tpu_custom_call.1} parent=47 // pred_check_branch
          %328 = sbr.rel (%p326) target = $region52
        $region51: #{tpu_custom_call.1} parent=47 // pred_region
          %329 = dma.done [#allocation5], 2048
        $region52: #{tpu_custom_call.1} parent=47 // pred_fallthru
          _
        %s330 = smul.u32 8, %s32
        %p331 = scmp.lt.s32.totalorder %s330, 15
        %s332 = scalar_select %p331, %s330, 15
        %s333 = smul.addr %s332, 2
        %s334 = smul.addr %s333, 8
        %s335 = scalar_lea.vmem %s0, %s334
        %p336 = pneg %p61
        %p337 = pneg %p58
        %s338 = smul.u32 8, %s32
        %p339 = scmp.lt.s32.totalorder %s338, 15
        %s340 = scalar_select %p339, %s338, 15
        %s341 = smul.addr %s340, 2
        %s342 = smul.addr %s341, 8
        %s343 = scalar_lea.vmem %s1, %s342
        %p344 = pneg %p87
        %p345 = pneg %p84
        %p346 = pneg %p108
        %p347 = pneg %p105
        %p348 = pneg %p129
        %p349 = pneg %p126
        %p350 = pneg %p150
        %p351 = pneg %p147
        %p352 = pneg %p171
        %p353 = pneg %p168
        %p354 = scmp.lt.s32.totalorder %s33, 0
        %s355 = scalar_select %p354, %s33, 0
        %s356 = smul.addr %s355, 8
        %s357 = scalar_lea.vmem %s6, %s356
        %p358 = pneg %p197
        %p359 = pneg %p194
        %p360 = pneg %p225
        %p361 = pneg %p222
        %s362 = sand.u32 %s212, 1
        %s363 = scalar_lea.sflag [#allocation6], %s362
        %s364 = sand.u32 %s212, 1
        %s365 = smul.addr %s364, 8
        %s366 = scalar_lea.vmem [#allocation7], %s365
        %p367 = pneg %p251
        %p368 = pneg %p248
        %s369 = sand.u32 %s238, 1
        %s370 = scalar_lea.sflag [#allocation9], %s369
        %s371 = sand.u32 %s238, 1
        %s372 = smul.addr %s371, 8
        %s373 = scalar_lea.vmem [#allocation8], %s372
        %s374 = smul.u32 8, %s32
        %p375 = scmp.lt.s32.totalorder %s374, 15
        %s376 = scalar_select %p375, %s374, 15
        %s377 = smul.addr %s376, 2
        %s378 = smul.addr %s377, 8
        %s379 = scalar_lea.vmem %s0, %s378
        %s380 = smul.u32 8, %s32
        %s381 = smul.u32 8, %s32
        %p382 = scmp.lt.s32.totalorder %s381, 15
        %s383 = scalar_select %p382, %s381, 15
        %s384 = smul.addr %s383, 2
        %s385 = smul.addr %s384, 8
        %s386 = scalar_lea.vmem %s1, %s385
        %s387 = smul.u32 8, %s32
        %p388 = scmp.lt.s32.totalorder %s33, 0
        %s389 = scalar_select %p388, %s33, 0
        %s390 = smul.addr %s389, 8
        %s391 = scalar_lea.vmem %s6, %s390
        %p392 = scmp.eq.s32.totalorder %s33, 0
        // Predicated region
        $region53: #{tpu_custom_call.1} parent=47 // pred_check
          %p393 = pneg %p392
        $region54: #{tpu_custom_call.1} parent=47 // pred_check_branch
          %395 = sbr.rel (%p393) target = $region56
        $region55: #{tpu_custom_call.1} parent=47 // pred_region
          %v396 = vld [vmem:[%s379] sm:$0xff]
          %v397 = vld [vmem:[%s379 + $0x8] sm:$0xff]
          %v398 = vld [vmem:[%s379 + $0x10] sm:$0xff]
          %v399 = vld [vmem:[%s379 + $0x18] sm:$0xff]
          %v400 = vld [vmem:[%s379 + $0x20] sm:$0xff]
          %v401 = vld [vmem:[%s379 + $0x28] sm:$0xff]
          %v402 = vld [vmem:[%s379 + $0x30] sm:$0xff]
          %v403 = vld [vmem:[%s379 + $0x38] sm:$0xff]
          %v404 = vld [vmem:[%s379 + $0x40] sm:$0xff]
          %v405 = vld [vmem:[%s379 + $0x48] sm:$0xff]
          %v406 = vld [vmem:[%s379 + $0x50] sm:$0xff]
          %v407 = vld [vmem:[%s379 + $0x58] sm:$0xff]
          %v408 = vld [vmem:[%s379 + $0x60] sm:$0xff]
          %v409 = vld [vmem:[%s379 + $0x68] sm:$0xff]
          %v410 = vld [vmem:[%s379 + $0x70] sm:$0xff]
          %v411 = vld [vmem:[%s379 + $0x78] sm:$0xff]
          %v412 = vld [vmem:[#allocation4] sm:$0xff]
          %v413 = vld [vmem:[#allocation4 + $0x8] sm:$0xff]
          %v414 = vld [vmem:[#allocation4 + $0x10] sm:$0xff]
          %v415 = vld [vmem:[#allocation4 + $0x18] sm:$0xff]
          %v416 = vld [vmem:[#allocation4 + $0x20] sm:$0xff]
          %v417 = vld [vmem:[#allocation4 + $0x28] sm:$0xff]
          %v418 = vld [vmem:[#allocation4 + $0x30] sm:$0xff]
          %v419 = vld [vmem:[#allocation4 + $0x38] sm:$0xff]
          %v420 = vld [vmem:[#allocation4 + $0x40] sm:$0xff]
          %v421 = vld [vmem:[#allocation4 + $0x48] sm:$0xff]
          %v422 = vld [vmem:[#allocation4 + $0x50] sm:$0xff]
          %v423 = vld [vmem:[#allocation4 + $0x58] sm:$0xff]
          %v424 = vld [vmem:[#allocation4 + $0x60] sm:$0xff]
          %v425 = vld [vmem:[#allocation4 + $0x68] sm:$0xff]
          %v426 = vld [vmem:[#allocation4 + $0x70] sm:$0xff]
          %v427 = vld [vmem:[#allocation4 + $0x78] sm:$0xff]
          %v428 = vld [vmem:[%s3] sm:$0x1]
          %v430 = vlaneseq
          %v431 = vshrl.u32 %v430, 7
          %v432 = vsub.s32 0, %v431
          %v433 = vrot.slane %v428, %v432
          %435 = vmatprep.subr.mxu0 0.0
          %436 = vmatpush1.msra.mxu0 %v412
          %437 = vmatprep.subr.mxu0 0.0
          %438 = vmatpush1.msra.mxu0 %v413
          %439 = vmatprep.subr.mxu0 0.0
          %440 = vmatpush1.msra.mxu0 %v414
          %441 = vmatprep.subr.mxu0 0.0
          %442 = vmatpush1.msra.mxu0 %v415
          %443 = vmatprep.subr.mxu0 0.0
          %444 = vmatpush1.msra.mxu0 %v416
          %445 = vmatprep.subr.mxu0 0.0
          %446 = vmatpush1.msra.mxu0 %v417
          %447 = vmatprep.subr.mxu0 0.0
          %448 = vmatpush1.msra.mxu0 %v418
          %449 = vmatprep.subr.mxu0 0.0
          %450 = vmatpush1.msra.mxu0 %v419
          %451 = vmatprep.subr.mxu0 0.0
          %452 = vmatpush1.msra.mxu0 %v420
          %453 = vmatprep.subr.mxu0 0.0
          %454 = vmatpush1.msra.mxu0 %v421
          %455 = vmatprep.subr.mxu0 0.0
          %456 = vmatpush1.msra.mxu0 %v422
          %457 = vmatprep.subr.mxu0 0.0
          %458 = vmatpush1.msra.mxu0 %v423
          %459 = vmatprep.subr.mxu0 0.0
          %460 = vmatpush1.msra.mxu0 %v424
          %461 = vmatprep.subr.mxu0 0.0
          %462 = vmatpush1.msra.mxu0 %v425
          %463 = vmatprep.subr.mxu0 0.0
          %464 = vmatpush1.msra.mxu0 %v426
          %465 = vmatprep.subr.mxu0 0.0
          %466 = vmatpush1.msra.mxu0 %v427
          %467 = vmatprep.subr.mxu0 0.0
          %468 = vmatpush1.msra.mxu0 0.0
          %469 = vmatprep.subr.mxu0 0.0
          %470 = vmatpush1.msra.mxu0 0.0
          %471 = vmatprep.subr.mxu0 0.0
          %472 = vmatpush1.msra.mxu0 0.0
          %473 = vmatprep.subr.mxu0 0.0
          %474 = vmatpush1.msra.mxu0 0.0
          %475 = vmatprep.subr.mxu0 0.0
          %476 = vmatpush1.msra.mxu0 0.0
          %477 = vmatprep.subr.mxu0 0.0
          %478 = vmatpush1.msra.mxu0 0.0
          %479 = vmatprep.subr.mxu0 0.0
          %480 = vmatpush1.msra.mxu0 0.0
          %481 = vmatprep.subr.mxu0 0.0
          %482 = vmatpush1.msra.mxu0 0.0
          %483 = vmatprep.subr.mxu0 0.0
          %484 = vmatpush1.msra.mxu0 0.0
          %485 = vmatprep.subr.mxu0 0.0
          %486 = vmatpush1.msra.mxu0 0.0
          %487 = vmatprep.subr.mxu0 0.0
          %488 = vmatpush1.msra.mxu0 0.0
          %489 = vmatprep.subr.mxu0 0.0
          %490 = vmatpush1.msra.mxu0 0.0
          %491 = vmatprep.subr.mxu0 0.0
          %492 = vmatpush1.msra.mxu0 0.0
          %493 = vmatprep.subr.mxu0 0.0
          %494 = vmatpush1.msra.mxu0 0.0
          %495 = vmatprep.subr.mxu0 0.0
          %496 = vmatpush1.msra.mxu0 0.0
          %497 = vmatprep.subr.mxu0 0.0
          %498 = vmatpush1.msra.mxu0 0.0
          %499 = vmatprep.mubr.f32.mxu0 0.0
          %500 = vmatmul.mubr.f32.gmra.mrb[0].mxu0 %v396
          %v501 = vpop.f32.mrb[0].mxu0
          %v502 = vadd.f32 %v433, %v501
          %v503 = vpop.f32.mrb[0].mxu0
          %504 = vmatprep.mubr.f32.mxu0 0.0
          %505 = vmatmul.mubr.f32.gmra.mrb[0].mxu0 %v397
          %v506 = vpop.f32.mrb[0].mxu0
          %v507 = vadd.f32 %v433, %v506
          %v508 = vpop.f32.mrb[0].mxu0
          %509 = vmatprep.mubr.f32.mxu0 0.0
          %510 = vmatmul.mubr.f32.gmra.mrb[0].mxu0 %v398
          %v511 = vpop.f32.mrb[0].mxu0
          %v512 = vadd.f32 %v433, %v511
          %v513 = vpop.f32.mrb[0].mxu0
          %514 = vmatprep.mubr.f32.mxu0 0.0
          %515 = vmatmul.mubr.f32.gmra.mrb[0].mxu0 %v399
          %v516 = vpop.f32.mrb[0].mxu0
          %v517 = vadd.f32 %v433, %v516
          %v518 = vpop.f32.mrb[0].mxu0
          %519 = vmatprep.mubr.f32.mxu0 0.0
          %520 = vmatmul.mubr.f32.gmra.mrb[0].mxu0 %v400
          %v521 = vpop.f32.mrb[0].mxu0
          %v522 = vadd.f32 %v433, %v521
          %v523 = vpop.f32.mrb[0].mxu0
          %524 = vmatprep.mubr.f32.mxu0 0.0
          %525 = vmatmul.mubr.f32.gmra.mrb[0].mxu0 %v401
          %v526 = vpop.f32.mrb[0].mxu0
          %v527 = vadd.f32 %v433, %v526
          %v528 = vpop.f32.mrb[0].mxu0
          %529 = vmatprep.mubr.f32.mxu0 0.0
          %530 = vmatmul.mubr.f32.gmra.mrb[0].mxu0 %v402
          %v531 = vpop.f32.mrb[0].mxu0
          %v532 = vadd.f32 %v433, %v531
          %v533 = vpop.f32.mrb[0].mxu0
          %534 = vmatprep.mubr.f32.mxu0 0.0
          %535 = vmatmul.mubr.f32.gmra.mrb[0].mxu0 %v403
          %v536 = vpop.f32.mrb[0].mxu0
          %v537 = vadd.f32 %v433, %v536
          %v538 = vpop.f32.mrb[0].mxu0
          %539 = vmatprep.mubr.f32.mxu0 0.0
          %540 = vmatmul.mubr.f32.gmra.mrb[0].mxu0 %v404
          %v541 = vpop.f32.mrb[0].mxu0
          %v542 = vadd.f32 %v433, %v541
          %v543 = vpop.f32.mrb[0].mxu0
          %544 = vmatprep.mubr.f32.mxu0 0.0
          %545 = vmatmul.mubr.f32.gmra.mrb[0].mxu0 %v405
          %v546 = vpop.f32.mrb[0].mxu0
          %v547 = vadd.f32 %v433, %v546
          %v548 = vpop.f32.mrb[0].mxu0
          %549 = vmatprep.mubr.f32.mxu0 0.0
          %550 = vmatmul.mubr.f32.gmra.mrb[0].mxu0 %v406
          %v551 = vpop.f32.mrb[0].mxu0
          %v552 = vadd.f32 %v433, %v551
          %v553 = vpop.f32.mrb[0].mxu0
          %554 = vmatprep.mubr.f32.mxu0 0.0
          %555 = vmatmul.mubr.f32.gmra.mrb[0].mxu0 %v407
          %v556 = vpop.f32.mrb[0].mxu0
          %v557 = vadd.f32 %v433, %v556
          %v558 = vpop.f32.mrb[0].mxu0
          %559 = vmatprep.mubr.f32.mxu0 0.0
          %560 = vmatmul.mubr.f32.gmra.mrb[0].mxu0 %v408
          %v561 = vpop.f32.mrb[0].mxu0
          %v562 = vadd.f32 %v433, %v561
          %v563 = vpop.f32.mrb[0].mxu0
          %564 = vmatprep.mubr.f32.mxu0 0.0
          %565 = vmatmul.mubr.f32.gmra.mrb[0].mxu0 %v409
          %v566 = vpop.f32.mrb[0].mxu0
          %v567 = vadd.f32 %v433, %v566
          %v568 = vpop.f32.mrb[0].mxu0
          %569 = vmatprep.mubr.f32.mxu0 0.0
          %570 = vmatmul.mubr.f32.gmra.mrb[0].mxu0 %v410
          %v571 = vpop.f32.mrb[0].mxu0
          %v572 = vadd.f32 %v433, %v571
          %v573 = vpop.f32.mrb[0].mxu0
          %574 = vmatprep.mubr.f32.mxu0 0.0
          %575 = vmatmul.mubr.f32.gmra.mrb[0].mxu0 %v411
          %v576 = vpop.f32.mrb[0].mxu0
          %v577 = vadd.f32 %v433, %v576
          %v578 = vpop.f32.mrb[0].mxu0
          %579 = vdwg.mxu0
          %v580 = vtanh.pop %v502
          %v581 = vtanh.pop %v507
          %v582 = vtanh.pop %v512
          %v583 = vtanh.pop %v517
          %v584 = vtanh.pop %v522
          %v585 = vtanh.pop %v527
          %v586 = vtanh.pop %v532
          %v587 = vtanh.pop %v537
          %v588 = vtanh.pop %v542
          %v589 = vtanh.pop %v547
          %v590 = vtanh.pop %v552
          %v591 = vtanh.pop %v557
          %v592 = vtanh.pop %v562
          %v593 = vtanh.pop %v567
          %v594 = vtanh.pop %v572
          %v595 = vtanh.pop %v577
          %v596 = vld [vmem:[%s386] sm:$0xff]
          %v597 = vld [vmem:[%s386 + $0x8] sm:$0xff]
          %v598 = vld [vmem:[%s386 + $0x10] sm:$0xff]
          %v599 = vld [vmem:[%s386 + $0x18] sm:$0xff]
          %v600 = vld [vmem:[%s386 + $0x20] sm:$0xff]
          %v601 = vld [vmem:[%s386 + $0x28] sm:$0xff]
          %v602 = vld [vmem:[%s386 + $0x30] sm:$0xff]
          %v603 = vld [vmem:[%s386 + $0x38] sm:$0xff]
          %v604 = vld [vmem:[%s386 + $0x40] sm:$0xff]
          %v605 = vld [vmem:[%s386 + $0x48] sm:$0xff]
          %v606 = vld [vmem:[%s386 + $0x50] sm:$0xff]
          %v607 = vld [vmem:[%s386 + $0x58] sm:$0xff]
          %v608 = vld [vmem:[%s386 + $0x60] sm:$0xff]
          %v609 = vld [vmem:[%s386 + $0x68] sm:$0xff]
          %v610 = vld [vmem:[%s386 + $0x70] sm:$0xff]
          %v611 = vld [vmem:[%s386 + $0x78] sm:$0xff]
          %613 = vset.pattern.permute.xlu0 0
          %614 = vperm.xlu0 %613, %v596
          %v615 = vpop.permute.xlu0 %614
          %618 = vset.pattern.permute.xlu0 0
          %619 = vperm.xlu0 %618, %v597
          %v620 = vpop.permute.xlu0 %619
          %623 = vset.pattern.permute.xlu0 0
          %624 = vperm.xlu0 %623, %v598
          %v625 = vpop.permute.xlu0 %624
          %628 = vset.pattern.permute.xlu0 0
          %629 = vperm.xlu0 %628, %v599
          %v630 = vpop.permute.xlu0 %629
          %633 = vset.pattern.permute.xlu0 0
          %634 = vperm.xlu0 %633, %v600
          %v635 = vpop.permute.xlu0 %634
          %638 = vset.pattern.permute.xlu0 0
          %639 = vperm.xlu0 %638, %v601
          %v640 = vpop.permute.xlu0 %639
          %643 = vset.pattern.permute.xlu0 0
          %644 = vperm.xlu0 %643, %v602
          %v645 = vpop.permute.xlu0 %644
          %648 = vset.pattern.permute.xlu0 0
          %649 = vperm.xlu0 %648, %v603
          %v650 = vpop.permute.xlu0 %649
          %653 = vset.pattern.permute.xlu0 0
          %654 = vperm.xlu0 %653, %v604
          %v655 = vpop.permute.xlu0 %654
          %658 = vset.pattern.permute.xlu0 0
          %659 = vperm.xlu0 %658, %v605
          %v660 = vpop.permute.xlu0 %659
          %663 = vset.pattern.permute.xlu0 0
          %664 = vperm.xlu0 %663, %v606
          %v665 = vpop.permute.xlu0 %664
          %668 = vset.pattern.permute.xlu0 0
          %669 = vperm.xlu0 %668, %v607
          %v670 = vpop.permute.xlu0 %669
          %673 = vset.pattern.permute.xlu0 0
          %674 = vperm.xlu0 %673, %v608
          %v675 = vpop.permute.xlu0 %674
          %678 = vset.pattern.permute.xlu0 0
          %679 = vperm.xlu0 %678, %v609
          %v680 = vpop.permute.xlu0 %679
          %683 = vset.pattern.permute.xlu0 0
          %684 = vperm.xlu0 %683, %v610
          %v685 = vpop.permute.xlu0 %684
          %688 = vset.pattern.permute.xlu0 0
          %689 = vperm.xlu0 %688, %v611
          %v690 = vpop.permute.xlu0 %689
          %v692 = vmul.f32 %v580, %v615
          %v693 = vmul.f32 %v581, %v620
          %v694 = vmul.f32 %v582, %v625
          %v695 = vmul.f32 %v583, %v630
          %v696 = vmul.f32 %v584, %v635
          %v697 = vmul.f32 %v585, %v640
          %v698 = vmul.f32 %v586, %v645
          %v699 = vmul.f32 %v587, %v650
          %v700 = vmul.f32 %v588, %v655
          %v701 = vmul.f32 %v589, %v660
          %v702 = vmul.f32 %v590, %v665
          %v703 = vmul.f32 %v591, %v670
          %v704 = vmul.f32 %v592, %v675
          %v705 = vmul.f32 %v593, %v680
          %v706 = vmul.f32 %v594, %v685
          %v707 = vmul.f32 %v595, %v690
          %v708 = vld [vmem:[%s4] sm:$0x1]
          %v710 = vlaneseq
          %v711 = vshrl.u32 %v710, 7
          %v712 = vsub.s32 0, %v711
          %v713 = vrot.slane %v708, %v712
          %v715 = vmul.f32 %v692, %v713
          %v716 = vmul.f32 %v693, %v713
          %v717 = vmul.f32 %v694, %v713
          %v718 = vmul.f32 %v695, %v713
          %v719 = vmul.f32 %v696, %v713
          %v720 = vmul.f32 %v697, %v713
          %v721 = vmul.f32 %v698, %v713
          %v722 = vmul.f32 %v699, %v713
          %v723 = vmul.f32 %v700, %v713
          %v724 = vmul.f32 %v701, %v713
          %v725 = vmul.f32 %v702, %v713
          %v726 = vmul.f32 %v703, %v713
          %v727 = vmul.f32 %v704, %v713
          %v728 = vmul.f32 %v705, %v713
          %v729 = vmul.f32 %v706, %v713
          %v730 = vmul.f32 %v707, %v713
          %731 = vadd.xlane.f32.xlu0 %v715
          %v732 = vpop.xlane.xlu0 %731
          %733 = vadd.xlane.f32.xlu0 %v716
          %v734 = vpop.xlane.xlu0 %733
          %735 = vadd.xlane.f32.xlu0 %v717
          %v736 = vpop.xlane.xlu0 %735
          %737 = vadd.xlane.f32.xlu0 %v718
          %v738 = vpop.xlane.xlu0 %737
          %739 = vadd.xlane.f32.xlu0 %v719
          %v740 = vpop.xlane.xlu0 %739
          %741 = vadd.xlane.f32.xlu0 %v720
          %v742 = vpop.xlane.xlu0 %741
          %743 = vadd.xlane.f32.xlu0 %v721
          %v744 = vpop.xlane.xlu0 %743
          %745 = vadd.xlane.f32.xlu0 %v722
          %v746 = vpop.xlane.xlu0 %745
          %747 = vadd.xlane.f32.xlu0 %v723
          %v748 = vpop.xlane.xlu0 %747
          %749 = vadd.xlane.f32.xlu0 %v724
          %v750 = vpop.xlane.xlu0 %749
          %751 = vadd.xlane.f32.xlu0 %v725
          %v752 = vpop.xlane.xlu0 %751
          %753 = vadd.xlane.f32.xlu0 %v726
          %v754 = vpop.xlane.xlu0 %753
          %755 = vadd.xlane.f32.xlu0 %v727
          %v756 = vpop.xlane.xlu0 %755
          %757 = vadd.xlane.f32.xlu0 %v728
          %v758 = vpop.xlane.xlu0 %757
          %759 = vadd.xlane.f32.xlu0 %v729
          %v760 = vpop.xlane.xlu0 %759
          %761 = vadd.xlane.f32.xlu0 %v730
          %v762 = vpop.xlane.xlu0 %761
          %s763 = sld [smem:[#allocation3]]
          %v764 = vstv %s763
          %v765 = vadd.f32 %v732, %v764
          %v766 = vadd.f32 %v734, %v764
          %v767 = vadd.f32 %v736, %v764
          %v768 = vadd.f32 %v738, %v764
          %v769 = vadd.f32 %v740, %v764
          %v770 = vadd.f32 %v742, %v764
          %v771 = vadd.f32 %v744, %v764
          %v772 = vadd.f32 %v746, %v764
          %v773 = vadd.f32 %v748, %v764
          %v774 = vadd.f32 %v750, %v764
          %v775 = vadd.f32 %v752, %v764
          %v776 = vadd.f32 %v754, %v764
          %v777 = vadd.f32 %v756, %v764
          %v778 = vadd.f32 %v758, %v764
          %v779 = vadd.f32 %v760, %v764
          %v780 = vadd.f32 %v762, %v764
          %v781 = vlaneseq
          %v782 = vshrl.u32 %v781, 7
          %v783 = vadd.s32 %v782, 8
          %vm784 = vcmp.lt.s32.totalorder %v782, 10
          %vm785 = vcmp.lt.s32.totalorder %v783, 10
          %v786 = vsel %vm784, %v765, -1e+30
          %v787 = vsel %vm785, %v766, -1e+30
          %v788 = vsel %vm784, %v767, -1e+30
          %v789 = vsel %vm785, %v768, -1e+30
          %v790 = vsel %vm784, %v769, -1e+30
          %v791 = vsel %vm785, %v770, -1e+30
          %v792 = vsel %vm784, %v771, -1e+30
          %v793 = vsel %vm785, %v772, -1e+30
          %v794 = vsel %vm784, %v773, -1e+30
          %v795 = vsel %vm785, %v774, -1e+30
          %v796 = vsel %vm784, %v775, -1e+30
          %v797 = vsel %vm785, %v776, -1e+30
          %v798 = vsel %vm784, %v777, -1e+30
          %v799 = vsel %vm785, %v778, -1e+30
          %v800 = vsel %vm784, %v779, -1e+30
          %v801 = vsel %vm785, %v780, -1e+30
          %v802 = vmax.f32 %v786, %v787
          %v803 = vrot.slane %v802, 4
          %v804 = vmax.f32 %v802, %v803
          %v805 = vrot.slane %v804, 2
          %v806 = vmax.f32 %v804, %v805
          %v807 = vrot.slane %v806, 1
          %v808 = vmax.f32 %v806, %v807
          %v809 = vmax.f32 %v788, %v789
          %v810 = vrot.slane %v809, 4
          %v811 = vmax.f32 %v809, %v810
          %v812 = vrot.slane %v811, 2
          %v813 = vmax.f32 %v811, %v812
          %v814 = vrot.slane %v813, 1
          %v815 = vmax.f32 %v813, %v814
          %v816 = vmax.f32 %v790, %v791
          %v817 = vrot.slane %v816, 4
          %v818 = vmax.f32 %v816, %v817
          %v819 = vrot.slane %v818, 2
          %v820 = vmax.f32 %v818, %v819
          %v821 = vrot.slane %v820, 1
          %v822 = vmax.f32 %v820, %v821
          %v823 = vmax.f32 %v792, %v793
          %v824 = vrot.slane %v823, 4
          %v825 = vmax.f32 %v823, %v824
          %v826 = vrot.slane %v825, 2
          %v827 = vmax.f32 %v825, %v826
          %v828 = vrot.slane %v827, 1
          %v829 = vmax.f32 %v827, %v828
          %v830 = vmax.f32 %v794, %v795
          %v831 = vrot.slane %v830, 4
          %v832 = vmax.f32 %v830, %v831
          %v833 = vrot.slane %v832, 2
          %v834 = vmax.f32 %v832, %v833
          %v835 = vrot.slane %v834, 1
          %v836 = vmax.f32 %v834, %v835
          %v837 = vmax.f32 %v796, %v797
          %v838 = vrot.slane %v837, 4
          %v839 = vmax.f32 %v837, %v838
          %v840 = vrot.slane %v839, 2
          %v841 = vmax.f32 %v839, %v840
          %v842 = vrot.slane %v841, 1
          %v843 = vmax.f32 %v841, %v842
          %v844 = vmax.f32 %v798, %v799
          %v845 = vrot.slane %v844, 4
          %v846 = vmax.f32 %v844, %v845
          %v847 = vrot.slane %v846, 2
          %v848 = vmax.f32 %v846, %v847
          %v849 = vrot.slane %v848, 1
          %v850 = vmax.f32 %v848, %v849
          %v851 = vmax.f32 %v800, %v801
          %v852 = vrot.slane %v851, 4
          %v853 = vmax.f32 %v851, %v852
          %v854 = vrot.slane %v853, 2
          %v855 = vmax.f32 %v853, %v854
          %v856 = vrot.slane %v855, 1
          %v857 = vmax.f32 %v855, %v856
          %v858 = vsub.f32 %v786, %v808
          %v859 = vsub.f32 %v787, %v808
          %v860 = vsub.f32 %v788, %v815
          %v861 = vsub.f32 %v789, %v815
          %v862 = vsub.f32 %v790, %v822
          %v863 = vsub.f32 %v791, %v822
          %v864 = vsub.f32 %v792, %v829
          %v865 = vsub.f32 %v793, %v829
          %v866 = vsub.f32 %v794, %v836
          %v867 = vsub.f32 %v795, %v836
          %v868 = vsub.f32 %v796, %v843
          %v869 = vsub.f32 %v797, %v843
          %v870 = vsub.f32 %v798, %v850
          %v871 = vsub.f32 %v799, %v850
          %v872 = vsub.f32 %v800, %v857
          %v873 = vsub.f32 %v801, %v857
          %v874 = vmul.f32 %v858, 1.442695
          %v875 = vpow.pop %v874
          %v876 = vmul.f32 %v859, 1.442695
          %v877 = vpow.pop %v876
          %v878 = vmul.f32 %v860, 1.442695
          %v879 = vpow.pop %v878
          %v880 = vmul.f32 %v861, 1.442695
          %v881 = vpow.pop %v880
          %v882 = vmul.f32 %v862, 1.442695
          %v883 = vpow.pop %v882
          %v884 = vmul.f32 %v863, 1.442695
          %v885 = vpow.pop %v884
          %v886 = vmul.f32 %v864, 1.442695
          %v887 = vpow.pop %v886
          %v888 = vmul.f32 %v865, 1.442695
          %v889 = vpow.pop %v888
          %v890 = vmul.f32 %v866, 1.442695
          %v891 = vpow.pop %v890
          %v892 = vmul.f32 %v867, 1.442695
          %v893 = vpow.pop %v892
          %v894 = vmul.f32 %v868, 1.442695
          %v895 = vpow.pop %v894
          %v896 = vmul.f32 %v869, 1.442695
          %v897 = vpow.pop %v896
          %v898 = vmul.f32 %v870, 1.442695
          %v899 = vpow.pop %v898
          %v900 = vmul.f32 %v871, 1.442695
          %v901 = vpow.pop %v900
          %v902 = vmul.f32 %v872, 1.442695
          %v903 = vpow.pop %v902
          %v904 = vmul.f32 %v873, 1.442695
          %v905 = vpow.pop %v904
          %v906 = vsel %vm784, %v875, 0.0
          %v907 = vsel %vm785, %v877, 0.0
          %v908 = vsel %vm784, %v879, 0.0
          %v909 = vsel %vm785, %v881, 0.0
          %v910 = vsel %vm784, %v883, 0.0
          %v911 = vsel %vm785, %v885, 0.0
          %v912 = vsel %vm784, %v887, 0.0
          %v913 = vsel %vm785, %v889, 0.0
          %v914 = vsel %vm784, %v891, 0.0
          %v915 = vsel %vm785, %v893, 0.0
          %v916 = vsel %vm784, %v895, 0.0
          %v917 = vsel %vm785, %v897, 0.0
          %v918 = vsel %vm784, %v899, 0.0
          %v919 = vsel %vm785, %v901, 0.0
          %v920 = vsel %vm784, %v903, 0.0
          %v921 = vsel %vm785, %v905, 0.0
          %v922 = vadd.f32 %v906, %v907
          %v923 = vrot.slane %v922, 4
          %v924 = vadd.f32 %v922, %v923
          %v925 = vrot.slane %v924, 2
          %v926 = vadd.f32 %v924, %v925
          %v927 = vrot.slane %v926, 1
          %v928 = vadd.f32 %v926, %v927
          %v929 = vadd.f32 %v908, %v909
          %v930 = vrot.slane %v929, 4
          %v931 = vadd.f32 %v929, %v930
          %v932 = vrot.slane %v931, 2
          %v933 = vadd.f32 %v931, %v932
          %v934 = vrot.slane %v933, 1
          %v935 = vadd.f32 %v933, %v934
          %v936 = vadd.f32 %v910, %v911
          %v937 = vrot.slane %v936, 4
          %v938 = vadd.f32 %v936, %v937
          %v939 = vrot.slane %v938, 2
          %v940 = vadd.f32 %v938, %v939
          %v941 = vrot.slane %v940, 1
          %v942 = vadd.f32 %v940, %v941
          %v943 = vadd.f32 %v912, %v913
          %v944 = vrot.slane %v943, 4
          %v945 = vadd.f32 %v943, %v944
          %v946 = vrot.slane %v945, 2
          %v947 = vadd.f32 %v945, %v946
          %v948 = vrot.slane %v947, 1
          %v949 = vadd.f32 %v947, %v948
          %v950 = vadd.f32 %v914, %v915
          %v951 = vrot.slane %v950, 4
          %v952 = vadd.f32 %v950, %v951
          %v953 = vrot.slane %v952, 2
          %v954 = vadd.f32 %v952, %v953
          %v955 = vrot.slane %v954, 1
          %v956 = vadd.f32 %v954, %v955
          %v957 = vadd.f32 %v916, %v917
          %v958 = vrot.slane %v957, 4
          %v959 = vadd.f32 %v957, %v958
          %v960 = vrot.slane %v959, 2
          %v961 = vadd.f32 %v959, %v960
          %v962 = vrot.slane %v961, 1
          %v963 = vadd.f32 %v961, %v962
          %v964 = vadd.f32 %v918, %v919
          %v965 = vrot.slane %v964, 4
          %v966 = vadd.f32 %v964, %v965
          %v967 = vrot.slane %v966, 2
          %v968 = vadd.f32 %v966, %v967
          %v969 = vrot.slane %v968, 1
          %v970 = vadd.f32 %v968, %v969
          %v971 = vadd.f32 %v920, %v921
          %v972 = vrot.slane %v971, 4
          %v973 = vadd.f32 %v971, %v972
          %v974 = vrot.slane %v973, 2
          %v975 = vadd.f32 %v973, %v974
          %v976 = vrot.slane %v975, 1
          %v977 = vadd.f32 %v975, %v976
          %v978 = vrcp.pop %v928
          %v979 = vrcp.pop %v935
          %v980 = vrcp.pop %v942
          %v981 = vrcp.pop %v949
          %v982 = vrcp.pop %v956
          %v983 = vrcp.pop %v963
          %v984 = vrcp.pop %v970
          %v985 = vrcp.pop %v977
          %v986 = vmul.f32 %v906, %v978
          %v987 = vmul.f32 %v907, %v978
          %v988 = vmul.f32 %v908, %v979
          %v989 = vmul.f32 %v909, %v979
          %v990 = vmul.f32 %v910, %v980
          %v991 = vmul.f32 %v911, %v980
          %v992 = vmul.f32 %v912, %v981
          %v993 = vmul.f32 %v913, %v981
          %v994 = vmul.f32 %v914, %v982
          %v995 = vmul.f32 %v915, %v982
          %v996 = vmul.f32 %v916, %v983
          %v997 = vmul.f32 %v917, %v983
          %v998 = vmul.f32 %v918, %v984
          %v999 = vmul.f32 %v919, %v984
          %v1000 = vmul.f32 %v920, %v985
          %v1001 = vmul.f32 %v921, %v985
          %v1002 = vmul.f32 %v692, %v986
          %v1003 = vmul.f32 %v693, %v987
          %v1004 = vmul.f32 %v694, %v988
          %v1005 = vmul.f32 %v695, %v989
          %v1006 = vmul.f32 %v696, %v990
          %v1007 = vmul.f32 %v697, %v991
          %v1008 = vmul.f32 %v698, %v992
          %v1009 = vmul.f32 %v699, %v993
          %v1010 = vmul.f32 %v700, %v994
          %v1011 = vmul.f32 %v701, %v995
          %v1012 = vmul.f32 %v702, %v996
          %v1013 = vmul.f32 %v703, %v997
          %v1014 = vmul.f32 %v704, %v998
          %v1015 = vmul.f32 %v705, %v999
          %v1016 = vmul.f32 %v706, %v1000
          %v1017 = vmul.f32 %v707, %v1001
          %v1018 = vadd.f32 %v1002, %v1003
          %v1019 = vrot.slane %v1018, 4
          %v1020 = vadd.f32 %v1018, %v1019
          %v1021 = vrot.slane %v1020, 2
          %v1022 = vadd.f32 %v1020, %v1021
          %v1023 = vrot.slane %v1022, 1
          %v1024 = vadd.f32 %v1022, %v1023
          %v1025 = vadd.f32 %v1004, %v1005
          %v1026 = vrot.slane %v1025, 4
          %v1027 = vadd.f32 %v1025, %v1026
          %v1028 = vrot.slane %v1027, 2
          %v1029 = vadd.f32 %v1027, %v1028
          %v1030 = vrot.slane %v1029, 1
          %v1031 = vadd.f32 %v1029, %v1030
          %v1032 = vadd.f32 %v1006, %v1007
          %v1033 = vrot.slane %v1032, 4
          %v1034 = vadd.f32 %v1032, %v1033
          %v1035 = vrot.slane %v1034, 2
          %v1036 = vadd.f32 %v1034, %v1035
          %v1037 = vrot.slane %v1036, 1
          %v1038 = vadd.f32 %v1036, %v1037
          %v1039 = vadd.f32 %v1008, %v1009
          %v1040 = vrot.slane %v1039, 4
          %v1041 = vadd.f32 %v1039, %v1040
          %v1042 = vrot.slane %v1041, 2
          %v1043 = vadd.f32 %v1041, %v1042
          %v1044 = vrot.slane %v1043, 1
          %v1045 = vadd.f32 %v1043, %v1044
          %v1046 = vadd.f32 %v1010, %v1011
          %v1047 = vrot.slane %v1046, 4
          %v1048 = vadd.f32 %v1046, %v1047
          %v1049 = vrot.slane %v1048, 2
          %v1050 = vadd.f32 %v1048, %v1049
          %v1051 = vrot.slane %v1050, 1
          %v1052 = vadd.f32 %v1050, %v1051
          %v1053 = vadd.f32 %v1012, %v1013
          %v1054 = vrot.slane %v1053, 4
          %v1055 = vadd.f32 %v1053, %v1054
          %v1056 = vrot.slane %v1055, 2
          %v1057 = vadd.f32 %v1055, %v1056
          %v1058 = vrot.slane %v1057, 1
          %v1059 = vadd.f32 %v1057, %v1058
          %v1060 = vadd.f32 %v1014, %v1015
          %v1061 = vrot.slane %v1060, 4
          %v1062 = vadd.f32 %v1060, %v1061
          %v1063 = vrot.slane %v1062, 2
          %v1064 = vadd.f32 %v1062, %v1063
          %v1065 = vrot.slane %v1064, 1
          %v1066 = vadd.f32 %v1064, %v1065
          %v1067 = vadd.f32 %v1016, %v1017
          %v1068 = vrot.slane %v1067, 4
          %v1069 = vadd.f32 %v1067, %v1068
          %v1070 = vrot.slane %v1069, 2
          %v1071 = vadd.f32 %v1069, %v1070
          %v1072 = vrot.slane %v1071, 1
          %v1073 = vadd.f32 %v1071, %v1072
          %vm1082 = vcmask 1041409
          %v1083 = vsel %vm1082, %v1031, %v1024
          %vm1084 = vcmask 1042434
          %v1085 = vsel %vm1084, %v1038, %v1083
          %vm1086 = vcmask 1043459
          %v1087 = vsel %vm1086, %v1045, %v1085
          %vm1088 = vcmask 1044484
          %v1089 = vsel %vm1088, %v1052, %v1087
          %vm1090 = vcmask 1045509
          %v1091 = vsel %vm1090, %v1059, %v1089
          %vm1092 = vcmask 1046534
          %v1093 = vsel %vm1092, %v1066, %v1091
          %vm1094 = vcmask 1047559
          %v1095 = vsel %vm1094, %v1073, %v1093
          %vm1097 = vcmask 261120
          %1098 = vst.msk [vmem:[#allocation2] sm:$0xff] %vm1097, %v1095
          %1099 = vst [vmem:[%s373] sm:$0xff] 0.0
        $region56: #{tpu_custom_call.1} parent=47 // pred_fallthru
          _
        %v1100 = vld [vmem:[#allocation2] sm:$0xff]
        %v1101 = vld [vmem:[%s391] sm:$0xff]
        %v1102 = vld [vmem:[%s391 + $0x8] sm:$0xff]
        %v1103 = vld [vmem:[%s391 + $0x10] sm:$0xff]
        %v1104 = vld [vmem:[%s391 + $0x18] sm:$0xff]
        %vm1105 = vcmask 261120
        %v1107 = vsel %vm1105, %v1100, 0
        %1109 = vmatprep.subr.mxu0 0.0
        %1110 = vmatpush1.msra.mxu0 %v1101
        %1111 = vmatprep.subr.mxu0 0.0
        %1112 = vmatpush1.msra.mxu0 %v1102
        %1113 = vmatprep.subr.mxu0 0.0
        %1114 = vmatpush1.msra.mxu0 %v1103
        %1115 = vmatprep.subr.mxu0 0.0
        %1116 = vmatpush1.msra.mxu0 %v1104
        %1117 = vmatprep.subr.mxu0 0.0
        %1118 = vmatpush1.msra.mxu0 0.0
        %1119 = vmatprep.subr.mxu0 0.0
        %1120 = vmatpush1.msra.mxu0 0.0
        %1121 = vmatprep.subr.mxu0 0.0
        %1122 = vmatpush1.msra.mxu0 0.0
        %1123 = vmatprep.subr.mxu0 0.0
        %1124 = vmatpush1.msra.mxu0 0.0
        %1125 = vmatprep.subr.mxu0 0.0
        %1126 = vmatpush1.msra.mxu0 0.0
        %1127 = vmatprep.subr.mxu0 0.0
        %1128 = vmatpush1.msra.mxu0 0.0
        %1129 = vmatprep.subr.mxu0 0.0
        %1130 = vmatpush1.msra.mxu0 0.0
        %1131 = vmatprep.subr.mxu0 0.0
        %1132 = vmatpush1.msra.mxu0 0.0
        %1133 = vmatprep.subr.mxu0 0.0
        %1134 = vmatpush1.msra.mxu0 0.0
        %1135 = vmatprep.subr.mxu0 0.0
        %1136 = vmatpush1.msra.mxu0 0.0
        %1137 = vmatprep.subr.mxu0 0.0
        %1138 = vmatpush1.msra.mxu0 0.0
        %1139 = vmatprep.subr.mxu0 0.0
        %1140 = vmatpush1.msra.mxu0 0.0
        %1141 = vmatprep.subr.mxu0 0.0
        %1142 = vmatpush1.msra.mxu0 0.0
        %1143 = vmatprep.subr.mxu0 0.0
        %1144 = vmatpush1.msra.mxu0 0.0
        %1145 = vmatprep.subr.mxu0 0.0
        %1146 = vmatpush1.msra.mxu0 0.0
        %1147 = vmatprep.subr.mxu0 0.0
        %1148 = vmatpush1.msra.mxu0 0.0
        %1149 = vmatprep.subr.mxu0 0.0
        %1150 = vmatpush1.msra.mxu0 0.0
        %1151 = vmatprep.subr.mxu0 0.0
        %1152 = vmatpush1.msra.mxu0 0.0
        %1153 = vmatprep.subr.mxu0 0.0
        %1154 = vmatpush1.msra.mxu0 0.0
        %1155 = vmatprep.subr.mxu0 0.0
        %1156 = vmatpush1.msra.mxu0 0.0
        %1157 = vmatprep.subr.mxu0 0.0
        %1158 = vmatpush1.msra.mxu0 0.0
        %1159 = vmatprep.subr.mxu0 0.0
        %1160 = vmatpush1.msra.mxu0 0.0
        %1161 = vmatprep.subr.mxu0 0.0
        %1162 = vmatpush1.msra.mxu0 0.0
        %1163 = vmatprep.subr.mxu0 0.0
        %1164 = vmatpush1.msra.mxu0 0.0
        %1165 = vmatprep.subr.mxu0 0.0
        %1166 = vmatpush1.msra.mxu0 0.0
        %1167 = vmatprep.subr.mxu0 0.0
        %1168 = vmatpush1.msra.mxu0 0.0
        %1169 = vmatprep.subr.mxu0 0.0
        %1170 = vmatpush1.msra.mxu0 0.0
        %1171 = vmatprep.subr.mxu0 0.0
        %1172 = vmatpush1.msra.mxu0 0.0
        %1173 = vmatprep.mubr.f32.mxu0 0.0
        %1174 = vmatmul.mubr.f32.gmra.mrb[0].mxu0 %v1107
        %v1175 = vpop.f32.mrb[0].mxu0
        %v1176 = vadd.f32 0.0, %v1175
        %v1177 = vpop.f32.mrb[0].mxu0
        %1178 = vdwg.mxu0
        %s1179 = smul.u32 %s33, 128
        %v1180 = vlaneseq
        %v1181 = vand.u32 %v1180, 127
        %v1182 = vstv %s1179
        %v1183 = vadd.s32 %v1182, %v1181
        %vm1184 = vcmp.lt.s32.totalorder %v1183, 8
        %v1185 = vmul.f32 %v1176, 1.442695
        %v1186 = vpow.pop %v1185
        %v1187 = vsel %vm1184, %v1186, 0.0
        %1188 = vst [vmem:[%s366] sm:$0xff] %v1187
        %v1189 = vld [vmem:[%s373] sm:$0xff]
        %1190 = vadd.xlane.f32.xlu0 %v1187
        %v1191 = vpop.xlane.xlu0 %1190
        %v1192 = vadd.f32 %v1189, %v1191
        %1193 = vst [vmem:[%s373] sm:$0xff] %v1192
        %s1194 = sand.u32 %s212, 1
        %s1195 = scalar_lea.sflag [#allocation6], %s1194
        %s1196 = sand.u32 %s212, 1
        %s1197 = smul.addr %s1196, 8
        %s1198 = scalar_lea.vmem [#allocation7], %s1197
        %s1199 = sand.u32 %s238, 1
        %s1200 = scalar_lea.sflag [#allocation9], %s1199
        %s1201 = sand.u32 %s238, 1
        %s1202 = smul.addr %s1201, 8
        %s1203 = scalar_lea.vmem [#allocation8], %s1202
        // Predicated region
        $region57: #{tpu_custom_call.1} parent=47 // pred_check
          %p1204 = pneg %p222
        $region58: #{tpu_custom_call.1} parent=47 // pred_check_branch
          %1206 = sbr.rel (%p1204) target = $region60
        $region59: #{tpu_custom_call.1} parent=47 // pred_region
          %s1208 = ssub.s32 128, 128
          %1209 = vsyncadd %s1195, %s1208
          %s1210 = sadd.s32 %s33, %s32
          %s1211 = smul.addr %s1210, 128
          %s1212 = scalar_lea.hbm %s7, %s1211
          %s1214 = sshll.u32 %s1198, 4
          %s1215 = int_to_ptr.vmem [resolvable:$true] %s1214
          %1217 = dma.vmem_to_hbm [thread:$0]  %s1215, 128, %s1212, %s1195
        $region60: #{tpu_custom_call.1} parent=47 // pred_fallthru
          _
        // Predicated region
        $region61: #{tpu_custom_call.1} parent=47 // pred_check
          %p1218 = pneg %p248
        $region62: #{tpu_custom_call.1} parent=47 // pred_check_branch
          %1220 = sbr.rel (%p1218) target = $region64
        $region63: #{tpu_custom_call.1} parent=47 // pred_region
          %s1222 = ssub.s32 128, 128
          %1223 = vsyncadd %s1200, %s1222
          %s1224 = smul.addr %s32, 128
          %s1225 = scalar_lea.hbm %s8, %s1224
          %s1227 = sshll.u32 %s1203, 4
          %s1228 = int_to_ptr.vmem [resolvable:$true] %s1227
          %1230 = dma.vmem_to_hbm [thread:$0]  %s1228, 128, %s1225, %s1200
        $region64: #{tpu_custom_call.1} parent=47 // pred_fallthru
          _
      $region48: #{tpu_custom_call.1} parent=5 // pred_fallthru
        _
      %p1231 = scmp.le.s32.totalorder 2, %s23
      // Predicated region
      $region65: #{tpu_custom_call.1} parent=5 // pred_check
        %p1232 = pneg %p1231
      $region66: #{tpu_custom_call.1} parent=5 // pred_check_branch
        %1234 = sbr.rel (%p1232) target = $region68
      $region67: #{tpu_custom_call.1} parent=5 // pred_region
        %s1235 = ssub.s32 %s23, 2
        // Predicated region
        $region69: #{tpu_custom_call.1} parent=67 // pred_check
          %p1236 = pneg %p228
        $region70: #{tpu_custom_call.1} parent=67 // pred_check_branch
          %1238 = sbr.rel (%p1236) target = $region72
        $region71: #{tpu_custom_call.1} parent=67 // pred_region
          %s1239 = sand.u32 %s213, 1
          %s1240 = scalar_lea.sflag [#allocation6], %s1239
          %s1241 = sand.u32 %s213, 1
          %s1242 = smul.addr %s1241, 8
          %s1243 = scalar_lea.vmem [#allocation7], %s1242
          %1244 = dma.done %s1240, 128
        $region72: #{tpu_custom_call.1} parent=67 // pred_fallthru
          _
        // Predicated region
        $region73: #{tpu_custom_call.1} parent=67 // pred_check
          %p1245 = pneg %p254
        $region74: #{tpu_custom_call.1} parent=67 // pred_check_branch
          %1247 = sbr.rel (%p1245) target = $region76
        $region75: #{tpu_custom_call.1} parent=67 // pred_region
          %s1248 = sand.u32 %s239, 1
          %s1249 = scalar_lea.sflag [#allocation9], %s1248
          %s1250 = sand.u32 %s239, 1
          %s1251 = smul.addr %s1250, 8
          %s1252 = scalar_lea.vmem [#allocation8], %s1251
          %1253 = dma.done %s1249, 128
        $region76: #{tpu_custom_call.1} parent=67 // pred_fallthru
          _
      $region68: #{tpu_custom_call.1} parent=5 // pred_fallthru
        _
    $region6: #{tpu_custom_call.1} parent=1 // loop_footer
      %s27 = sadd.s32 1, %s23
    $region7: #{tpu_custom_call.1} parent=1 // loop_footer_branch
      %22 = sbr.rel target = $region3
    $region8: #{tpu_custom_call.1} parent=1 // loop_exit
      _
    %1254 = vsyncpa [#allocation5], 1
    %s1255 = scalar_lea.sflag [#allocation5], 1
    %1256 = vsyncpa %s1255, 1
    %1257 = vsyncpa [#allocation6], 1
    %s1258 = scalar_lea.sflag [#allocation6], 1
    %1259 = vsyncpa %s1258, 1
    %1260 = vsyncpa [#allocation9], 1
    %s1261 = scalar_lea.sflag [#allocation9], 1
    %1262 = vsyncpa %s1261, 1

</llo_original>
